<compile_context>
chip_gen: v5e
topology: v5e:2x2
jax: 0.10.0
libtpu: 0.0.40
codegen_flags: <defaults>
</compile_context>

<pallas_src>
import functools

import jax
import jax.numpy as jnp
import numpy as np
from jax.experimental import pallas as pl
from jax.experimental.pallas import tpu as pltpu

F_FEATURES = 14
LANES = 128
LOSS_LANES = 128            # lane-dense scalar-output slab width
# Batch-tile cap (lanes).  2 inputs x 2 buffers x (16 sublanes x TB x 4B)
# + (16 x TB x 4B) accumulator ~= 10 MiB at TB = 32768: safe on every
# generation at default scoped-VMEM limits (v5e 16 MiB, v6e/v7x 32 MiB).
MAX_BATCH_TILE = 32768


def _wsl1_kernel(coef_ref, pred_ref, target_ref, loss_ref, acc_ref, *, beta):
    """Accumulate raw smooth-L1 over batch tiles; weight + reduce at the end."""
    j = pl.program_id(1)

    @pl.when(j == 0)
    def _init():
        acc_ref[...] = jnp.zeros_like(acc_ref)

    # Upcast after load: all vector math in f32 regardless of input dtype
    # (bf16 inputs are accepted and halve HBM traffic; v5e has no bf16 VPU).
    p = pred_ref[...].astype(jnp.float32)            # (F, TB)
    t = target_ref[...].astype(jnp.float32)          # (F, TB)
    diff = jnp.abs(p - t)
    if beta > 0.0:
        sl1 = jnp.where(diff < beta, (0.5 / beta) * diff * diff, diff - 0.5 * beta)
    else:
        # torch SmoothL1 degrades to plain L1 when beta == 0 (quadratic branch
        # is never selected since diff >= 0); also keeps padded columns at 0.
        sl1 = diff

    # Hot loop is coefficient-free (linearity): weights/mask/normalization are
    # applied once at finalize, removing a per-element VPU mul and the
    # per-step (F,1)->(F,TB) lane broadcast.
    acc_ref[...] += sl1

    @pl.when(j == pl.num_programs(1) - 1)
    def _finalize():
        row = jnp.sum(acc_ref[...], axis=1, keepdims=True)       # (F, 1), single XLU reduce
        total = jnp.sum(coef_ref[...] * row)                     # weighted + normalized
        loss_ref[...] = jnp.full(loss_ref.shape, total, dtype=jnp.float32)


def _pick_tiling(B):
    """TB = min(round_up(B,128), cap); pad batch to a tile multiple; 2-way core split."""
    tb = min(-(-B // LANES) * LANES, MAX_BATCH_TILE)
    n_tiles = -(-B // tb)
    if n_tiles >= 2:
        nc = 2                                   # v7x: shard batch over both TensorCores
        n_tiles = -(-n_tiles // nc) * nc         # round up so the split is even
    else:
        nc = 1
    return n_tiles * tb, tb, nc, n_tiles // nc


def weighted_smooth_l1_loss(pred, target, joint_weights, learning_mask, beta=1.0):
    """Forward of WeightedSmoothL1Loss.  pred/target: (B, 14).  Returns scalar loss."""
    B, F = pred.shape
    assert F == F_FEATURES, "WeightedSmoothL1Loss hard-codes 14 joint dims"

    # Fused per-feature coefficient column: joint_weights * mask / (B * active).
    # active_dims == 0 => zero coefficients => loss 0.0 (torch semantics).
    maskf = learning_mask.astype(jnp.float32)
    active = jnp.sum(maskf)
    denom = jnp.float32(B) * active
    coef = joint_weights.astype(jnp.float32) * maskf
    coef = jnp.where(active > 0.0, coef / jnp.maximum(denom, 1.0), 0.0).reshape(F, 1)

    Bp, TB, NC, steps = _pick_tiling(B)

    # Lane-dense layout: batch on the lane axis.  The transpose (and pad, only
    # when needed) is allowed to fuse into the pallas_call operands.
    pred_t = pred.T                                               # (F, B)
    target_t = target.T
    if Bp != B:
        # Padded columns: diff = 0 -> smooth_l1 = 0, so they contribute nothing.
        pred_t = jnp.pad(pred_t, ((0, 0), (0, Bp - B)))
        target_t = jnp.pad(target_t, ((0, 0), (0, Bp - B)))

    loss_slab = pl.pallas_call(
        functools.partial(_wsl1_kernel, beta=float(beta)),
        out_shape=jax.ShapeDtypeStruct((NC, 8, LOSS_LANES), jnp.float32),
        grid=(NC, steps),
        in_specs=[
            pl.BlockSpec((F, 1), lambda c, j: (0, 0)),            # fused coefficient column
            pl.BlockSpec((F, TB), lambda c, j: (0, c * steps + j)),   # pred batch tile
            pl.BlockSpec((F, TB), lambda c, j: (0, c * steps + j)),   # target batch tile
        ],
        out_specs=pl.BlockSpec((1, 8, LOSS_LANES), lambda c, j: (c, 0, 0)),
        scratch_shapes=[pltpu.VMEM((F, TB), jnp.float32)],        # per-core resident acc
        compiler_params=pltpu.CompilerParams(
            dimension_semantics=("parallel", "arbitrary"),        # core split x reduction
            allow_input_fusion=[False, True, True],               # fuse transpose/pad in
        ),
    )(coef, pred_t, target_t)

    # Sum the per-core partials (NC == 1 or 2).
    return jnp.sum(loss_slab[:, 0, 0])


def weighted_smooth_l1_loss_ref(pred, target, joint_weights, learning_mask, beta=1.0):
    """Pure-JAX reference mirroring the PyTorch forward."""
    diff = jnp.abs(pred - target)
    if beta > 0.0:
        sl1 = jnp.where(diff < beta, 0.5 * diff * diff / beta, diff - 0.5 * beta)
    else:
        sl1 = diff
    masked_w = joint_weights * learning_mask.astype(jnp.float32)
    weighted = sl1 * masked_w[None, :]
    active = jnp.sum(learning_mask.astype(jnp.float32))
    return jnp.where(active > 0,
                     jnp.sum(weighted) / (pred.shape[0] * jnp.maximum(active, 1.0)),
                     0.0)


if __name__ == "__main__":
    F = F_FEATURES
    key = jax.random.PRNGKey(0)
    k1, k2, k3, k4 = jax.random.split(key, 4)

    # Module buffers (__init__): joint_weights ones with wrist indices [4, 11] = 2.0,
    # learning_mask from a nontrivial learning_dim subset.
    joint_weights = jnp.ones((F,), jnp.float32).at[jnp.array([4, 11])].set(2.0)
    learning_dim = [0, 1, 2, 3, 4, 5, 7, 8, 11, 12, 13]
    learning_mask = jnp.zeros((F,), jnp.bool_).at[jnp.array(learning_dim)].set(True)

    # Small batch (single 128-lane tile) and a larger batch that now runs as a
    # single 384-lane tile (pad-to-tile instead of three 128-lane grid steps).
    cases = (
        (2, k1, k2, 1.0),
        (300, k3, k4, 1.0),
        (2, k1, k2, 0.0),    # beta == 0: L1 degradation, no trace-time crash
    )
    for B, kp, kt, beta in cases:
        pred = 2.0 * jax.random.normal(kp, (B, F), dtype=jnp.float32)   # hit both branches
        target = jax.random.normal(kt, (B, F), dtype=jnp.float32)

        loss = weighted_smooth_l1_loss(pred, target, joint_weights, learning_mask, beta=beta)
        jax.block_until_ready(loss)

        loss_ref = weighted_smooth_l1_loss_ref(pred, target, joint_weights,
                                               learning_mask, beta=beta)
        np.testing.assert_allclose(np.asarray(loss), np.asarray(loss_ref),
                                   rtol=1e-5, atol=1e-6)

    print("KERNEL_OK")
</pallas_src>

<mosaic_0001>
module attributes {stable_mosaic.version = 11 : i64} {
  func.func @_wsl1_kernel(%arg0: i32, %arg1: i32, %arg2: memref<14x1xf32, #tpu.memory_space<vmem>>, %arg3: memref<14x128xf32, #tpu.memory_space<vmem>>, %arg4: memref<14x128xf32, #tpu.memory_space<vmem>>, %arg5: memref<1x8x128xf32, #tpu.memory_space<vmem>>, %arg6: memref<14x128xf32, #tpu.memory_space<vmem>>) attributes {dimension_semantics = [#tpu.dimension_semantics<parallel>, #tpu.dimension_semantics<arbitrary>], iteration_bounds = array<i64: 1, 1>, scalar_prefetch = 0 : i64, scratch_operands = 1 : i64, tpu.core_type = #tpu.core_type<tc>, window_params = [{pipeline_mode = #tpu.pipeline_mode<synchronous>, transform_indices = @transform_0, window_bounds = array<i64: 14, 1>}, {transform_indices = @transform_1, window_bounds = array<i64: 14, 128>}, {transform_indices = @transform_2, window_bounds = array<i64: 14, 128>}, {transform_indices = @transform_3, window_bounds = array<i64: 1, 8, 128>}]} {
    %c0_i32 = arith.constant 0 : i32
    %0 = arith.cmpi eq, %arg1, %c0_i32 : i32
    %1 = arith.extui %0 : i1 to i32
    %c0_i32_0 = arith.constant 0 : i32
    %2 = arith.cmpi ne, %1, %c0_i32_0 : i32
    scf.if %2 {
      %cst_12 = arith.constant 0.000000e+00 : f32
      %21 = vector.broadcast %cst_12 : f32 to vector<14x128xf32>
      %c0_13 = arith.constant 0 : index
      %c0_14 = arith.constant 0 : index
      %22 = vector.load %arg6[%c0_13, %c0_14] : memref<14x128xf32, #tpu.memory_space<vmem>>, vector<14x128xf32>
      tpu.vector_store %arg6[%c0_13, %c0_14], %21 {strides = array<i32>} : memref<14x128xf32, #tpu.memory_space<vmem>>, vector<14x128xf32>,
    } else {
    }
    %c0 = arith.constant 0 : index
    %c0_1 = arith.constant 0 : index
    %3 = vector.load %arg3[%c0, %c0_1] : memref<14x128xf32, #tpu.memory_space<vmem>>, vector<14x128xf32>
    %c0_2 = arith.constant 0 : index
    %c0_3 = arith.constant 0 : index
    %4 = vector.load %arg4[%c0_2, %c0_3] : memref<14x128xf32, #tpu.memory_space<vmem>>, vector<14x128xf32>
    %5 = arith.subf %3, %4 : vector<14x128xf32>
    %6 = math.absf %5 : vector<14x128xf32>
    %cst = arith.constant 1.000000e+00 : f32
    %7 = vector.broadcast %cst : f32 to vector<14x128xf32>
    %8 = arith.cmpf olt, %6, %7 : vector<14x128xf32>
    %cst_4 = arith.constant 5.000000e-01 : f32
    %9 = vector.broadcast %cst_4 : f32 to vector<14x128xf32>
    %10 = arith.mulf %9, %6 : vector<14x128xf32>
    %11 = arith.mulf %10, %6 : vector<14x128xf32>
    %cst_5 = arith.constant 5.000000e-01 : f32
    %12 = vector.broadcast %cst_5 : f32 to vector<14x128xf32>
    %13 = arith.subf %6, %12 : vector<14x128xf32>
    %14 = arith.select %8, %11, %13 : vector<14x128xi1>, vector<14x128xf32>
    %c0_6 = arith.constant 0 : index
    %c0_7 = arith.constant 0 : index
    %15 = vector.load %arg6[%c0_6, %c0_7] : memref<14x128xf32, #tpu.memory_space<vmem>>, vector<14x128xf32>
    %16 = arith.addf %15, %14 : vector<14x128xf32>
    %c0_8 = arith.constant 0 : index
    %c0_9 = arith.constant 0 : index
    %17 = vector.load %arg6[%c0_8, %c0_9] : memref<14x128xf32, #tpu.memory_space<vmem>>, vector<14x128xf32>
    tpu.vector_store %arg6[%c0_8, %c0_9], %16 {strides = array<i32>} : memref<14x128xf32, #tpu.memory_space<vmem>>, vector<14x128xf32>,
    %c0_i32_10 = arith.constant 0 : i32
    %18 = arith.cmpi eq, %arg1, %c0_i32_10 : i32
    %19 = arith.extui %18 : i1 to i32
    %c0_i32_11 = arith.constant 0 : i32
    %20 = arith.cmpi ne, %19, %c0_i32_11 : i32
    scf.if %20 {
      %c0_12 = arith.constant 0 : index
      %c0_13 = arith.constant 0 : index
      %21 = vector.load %arg6[%c0_12, %c0_13] : memref<14x128xf32, #tpu.memory_space<vmem>>, vector<14x128xf32>
      %cst_14 = arith.constant dense<0.000000e+00> : vector<14xf32>
      %22 = vector.multi_reduction <add>, %21, %cst_14 [1] : vector<14x128xf32> to vector<14xf32>
      %23 = vector.shape_cast %22 : vector<14xf32> to vector<14x1xf32>
      %c0_15 = arith.constant 0 : index
      %c0_16 = arith.constant 0 : index
      %24 = vector.load %arg2[%c0_15, %c0_16] : memref<14x1xf32, #tpu.memory_space<vmem>>, vector<14x1xf32>
      %25 = arith.mulf %24, %23 : vector<14x1xf32>
      %26 = vector.shape_cast %25 : vector<14x1xf32> to vector<1x14x1xf32>
      %cst_17 = arith.constant dense<0.000000e+00> : vector<1xf32>
      %27 = vector.multi_reduction <add>, %26, %cst_17 [1, 2] : vector<1x14x1xf32> to vector<1xf32>
      %28 = vector.shape_cast %27 : vector<1xf32> to vector<1x1x1xf32>
      %29 = vector.extract %28[0, 0, 0] : f32 from vector<1x1x1xf32>
      %30 = vector.broadcast %29 : f32 to vector<1x8x128xf32>
      %c0_18 = arith.constant 0 : index
      %c0_19 = arith.constant 0 : index
      %c0_20 = arith.constant 0 : index
      %31 = vector.load %arg5[%c0_18, %c0_19, %c0_20] : memref<1x8x128xf32, #tpu.memory_space<vmem>>, vector<1x8x128xf32>
      tpu.vector_store %arg5[%c0_18, %c0_19, %c0_20], %30 {strides = array<i32>} : memref<1x8x128xf32, #tpu.memory_space<vmem>>, vector<1x8x128xf32>,
    } else {
    }
    return
  }
  func.func @transform_0(%arg0: i32, %arg1: i32) -> (i32, i32) {
    %c0_i32 = arith.constant 0 : i32
    %c0_i32_0 = arith.constant 0 : i32
    %c0_i32_1 = arith.constant 0 : i32
    return %c0_i32, %c0_i32_0 : i32, i32
  }
  func.func @transform_1(%arg0: i32, %arg1: i32) -> (i32, i32) {
    %c1_i32 = arith.constant 1 : i32
    %0 = arith.muli %arg0, %c1_i32 : i32
    %1 = arith.addi %0, %arg1 : i32
    %c0_i32 = arith.constant 0 : i32
    %c0_i32_0 = arith.constant 0 : i32
    return %c0_i32, %1 : i32, i32
  }
  func.func @transform_2(%arg0: i32, %arg1: i32) -> (i32, i32) {
    %c1_i32 = arith.constant 1 : i32
    %0 = arith.muli %arg0, %c1_i32 : i32
    %1 = arith.addi %0, %arg1 : i32
    %c0_i32 = arith.constant 0 : i32
    %c0_i32_0 = arith.constant 0 : i32
    return %c0_i32, %1 : i32, i32
  }
  func.func @transform_3(%arg0: i32, %arg1: i32) -> (i32, i32, i32) {
    %c0_i32 = arith.constant 0 : i32
    %c0_i32_0 = arith.constant 0 : i32
    %c0_i32_1 = arith.constant 0 : i32
    return %arg0, %c0_i32, %c0_i32_0 : i32, i32, i32
  }
}

</mosaic_0001>

<llo_original>
// kernel: tpu_custom_call.1
$region0: #{tpu_custom_call.1}
  #allocation0 [shape = 'u32[]', space=smem, size = 0x4, offset = 0x4, fixed_abs, tag = 'smem constant byte address 0x4 - core index']
  #allocation1 [shape = 'u32[72,128]{1,0:T(1,128)}', space=vmem, size = 0x9000, scoped, tag = 'internal scratch']
  #allocation2 [shape = 'f32[14,128]{1,0:T(8,128)}', space=vmem, size = 0x2000, scoped, tag = 'scratch operand']
  %s0 = inlined_call_operand.vmem [shape: f32[14,1], index: 0, kind: input, shape index: {}]
  %s1 = inlined_call_operand.vmem [shape: f32[14,128], index: 1, kind: input, shape index: {}]
  %s2 = inlined_call_operand.hbm [shape: f32[14,128], index: 2, kind: input, shape index: {}]
  %s3 = inlined_call_operand.hbm [shape: f32[1,8,128], index: 3, kind: output, shape index: {}]
  %s4 = sld [smem:[#allocation0]]
  $region34: #{tpu_custom_call.1} parent=0
    _
  %s6 = ssub.s32 1, %s4
  %s7 = scalar_select 0, %s6, %s4
  $region1: #{tpu_custom_call.1} parent=0
    #allocation3 [shape = 'u8[8192]{0}', space=vmem, size = 0x2000, scoped, tag = 'input window, operand 2, single buffered']
    #allocation4 [shape = 's32[1]{0}', space=sflag, size = 0x4, scoped, tag = 'scoped memory for tpu_custom_call.1']
    #allocation5 [shape = 's32[1]{0}', space=sflag, size = 0x4, scoped, tag = 'scoped memory for tpu_custom_call.1']
    #allocation6 [shape = 'u8[4096]{0}', space=vmem, size = 0x1000, scoped, tag = 'output window, operand 0, single buffered']
    %8 = vsyncpa [#allocation4], 0
    %9 = vsyncpa [#allocation5], 0
    // Predicated region
    $region2: #{tpu_custom_call.1} parent=1 // pred_check
      _
    $region3: #{tpu_custom_call.1} parent=1 // pred_check_branch
      %11 = sbr.rel (0) target = $region5
    $region4: #{tpu_custom_call.1} parent=1 // pred_region
      _
    $region5: #{tpu_custom_call.1} parent=1 // pred_fallthru
      _
    // Predicated region
    $region6: #{tpu_custom_call.1} parent=1 // pred_check
      _
    $region7: #{tpu_custom_call.1} parent=1 // pred_check_branch
      %13 = sbr.rel (0) target = $region9
    $region8: #{tpu_custom_call.1} parent=1 // pred_region
      %s14 = sadd.s32 0, 0
      %p15 = scmp.lt.s32.totalorder %s14, 0
      %s16 = scalar_select %p15, %s14, 0
      %s17 = smul.addr %s16, 8
      %s18 = scalar_lea.vmem %s1, %s17
      %s19 = sadd.s32 0, 0
    $region9: #{tpu_custom_call.1} parent=1 // pred_fallthru
      _
    // Predicated region
    $region10: #{tpu_custom_call.1} parent=1 // pred_check
      _
    $region11: #{tpu_custom_call.1} parent=1 // pred_check_branch
      %21 = sbr.rel (0) target = $region13
    $region12: #{tpu_custom_call.1} parent=1 // pred_region
      %s22 = sadd.s32 0, 0
      %24 = vsyncadd [#allocation4], 0
      %s25 = smul.addr %s22, 8
      %s26 = scalar_lea.hbm %s2, %s25
      %s27 = sshll.u32 %s26, 4
      %s28 = int_to_ptr.hbm [resolvable:$true] %s27
      %s29 = sshll.u32 [#allocation3], 4
      %s30 = int_to_ptr.vmem [resolvable:$true] %s29
      %35 = dma.hbm_to_vmem [thread:$0]  %s28, 256, %s30, [#allocation4], 128, 128, 8
    $region13: #{tpu_custom_call.1} parent=1 // pred_fallthru
      _
    // Predicated region
    $region14: #{tpu_custom_call.1} parent=1 // pred_check
      _
    $region15: #{tpu_custom_call.1} parent=1 // pred_check_branch
      %37 = sbr.rel (0) target = $region17
    $region16: #{tpu_custom_call.1} parent=1 // pred_region
      %39 = dma.done [#allocation4], 256
    $region17: #{tpu_custom_call.1} parent=1 // pred_fallthru
      _
    %s40 = sadd.s32 0, 0
    %p41 = scmp.lt.s32.totalorder %s40, 0
    %s42 = scalar_select %p41, %s40, 0
    %s43 = smul.addr %s42, 8
    %s44 = scalar_lea.vmem %s1, %s43
    %s45 = sadd.s32 0, 0
    %p46 = scmp.lt.s32.totalorder %s45, 0
    %s47 = scalar_select %p46, %s45, 0
    %s48 = smul.addr %s47, 8
    %s49 = scalar_lea.vmem %s1, %s48
    %s50 = sadd.s32 0, 0
    %s51 = sadd.s32 0, 0
    %p52 = scmp.eq.s32.totalorder 0, 0
    // Predicated region
    $region18: #{tpu_custom_call.1} parent=1 // pred_check
      %p53 = pneg %p52
    $region19: #{tpu_custom_call.1} parent=1 // pred_check_branch
      %55 = sbr.rel (%p53) target = $region21
    $region20: #{tpu_custom_call.1} parent=1 // pred_region
      %56 = vst [vmem:[#allocation2] sm:$0xff] 0.0
      %57 = vst [vmem:[#allocation2 + $0x8] sm:$0x3f] 0.0
    $region21: #{tpu_custom_call.1} parent=1 // pred_fallthru
      _
    %v58 = vld [vmem:[%s49] sm:$0xff]
    %v59 = vld [vmem:[%s49 + $0x8] sm:$0x3f]
    %v60 = vld [vmem:[#allocation3] sm:$0xff]
    %v61 = vld [vmem:[#allocation3 + $0x8] sm:$0x3f]
    %v62 = vsub.f32 %v58, %v60
    %v63 = vsub.f32 %v59, %v61
    %v64 = vand.u32 2147483647, %v62
    %v65 = vand.u32 2147483647, %v63
    %vm66 = vcmp.lt.f32.partialorder %v64, 1.0
    %vm67 = vcmp.lt.f32.partialorder %v65, 1.0
    %v68 = vmul.f32 %v64, 0.5
    %v69 = vmul.f32 %v65, 0.5
    %v70 = vmul.f32 %v68, %v64
    %v71 = vmul.f32 %v69, %v65
    %v72 = vsub.f32 %v64, 0.5
    %v73 = vsub.f32 %v65, 0.5
    %v74 = vsel %vm66, %v70, %v72
    %v75 = vsel %vm67, %v71, %v73
    %v76 = vld [vmem:[#allocation2] sm:$0xff]
    %v77 = vld [vmem:[#allocation2 + $0x8] sm:$0x3f]
    %v78 = vadd.f32 %v76, %v74
    %v79 = vadd.f32 %v77, %v75
    %80 = vst [vmem:[#allocation2] sm:$0xff] %v78
    %81 = vst [vmem:[#allocation2 + $0x8] sm:$0x3f] %v79
    // Predicated region
    $region22: #{tpu_custom_call.1} parent=1 // pred_check
      %p82 = pneg %p52
    $region23: #{tpu_custom_call.1} parent=1 // pred_check_branch
      %84 = sbr.rel (%p82) target = $region25
    $region24: #{tpu_custom_call.1} parent=1 // pred_region
      %v85 = vld [vmem:[#allocation2] sm:$0xff]
      %v86 = vld [vmem:[#allocation2 + $0x8] sm:$0x3f]
      %87 = vadd.xlane.f32.xlu0 %v85
      %v88 = vpop.xlane.xlu0 %87
      %vm89 = vcmask 1045504
      %v90 = vsel %vm89, %v86, 0.0
      %91 = vadd.xlane.f32.xlu0 %v90
      %v92 = vpop.xlane.xlu0 %91
      %v93 = vld [vmem:[%s0] sm:$0xff]
      %v94 = vld [vmem:[%s0 + $0x8] sm:$0x3f]
      %v95 = vmul.f32 %v93, %v88
      %v96 = vmul.f32 %v94, %v92
      %vm97 = vcmask 7168
      %v98 = vsel %vm97, %v95, 0.0
      %vm99 = vcmask 5120
      %v100 = vsel %vm99, %v96, 0.0
      %v101 = vadd.f32 %v98, %v100
      %102 = vadd.xlane.f32.xlu0 %v101
      %v103 = vpop.xlane.xlu0 %102
      %v104 = vrot.slane %v103, 4
      %v105 = vadd.f32 %v103, %v104
      %v106 = vrot.slane %v105, 2
      %v107 = vadd.f32 %v105, %v106
      %v108 = vrot.slane %v107, 1
      %v109 = vadd.f32 %v107, %v108
      %s110 = vtos %v109
      %v111 = vstv %s110
      %112 = vst [vmem:[#allocation6] sm:$0xff] %v111
    $region25: #{tpu_custom_call.1} parent=1 // pred_fallthru
      _
    // Predicated region
    $region26: #{tpu_custom_call.1} parent=1 // pred_check
      _
    $region27: #{tpu_custom_call.1} parent=1 // pred_check_branch
      %114 = sbr.rel (0) target = $region29
    $region28: #{tpu_custom_call.1} parent=1 // pred_region
      %116 = vsyncadd [#allocation5], 0
      %s118 = sshll.u32 [#allocation6], 4
      %s119 = int_to_ptr.vmem [resolvable:$true] %s118
      %s120 = sshll.u32 %s3, 4
      %s121 = int_to_ptr.hbm [resolvable:$true] %s120
      %123 = dma.vmem_to_hbm [thread:$0]  %s119, 128, %s121, [#allocation5]
    $region29: #{tpu_custom_call.1} parent=1 // pred_fallthru
      _
    // Predicated region
    $region30: #{tpu_custom_call.1} parent=1 // pred_check
      _
    $region31: #{tpu_custom_call.1} parent=1 // pred_check_branch
      %125 = sbr.rel (0) target = $region33
    $region32: #{tpu_custom_call.1} parent=1 // pred_region
      %127 = dma.done [#allocation5], 128
    $region33: #{tpu_custom_call.1} parent=1 // pred_fallthru
      _
    %128 = vsyncpa [#allocation4], 1
    %129 = vsyncpa [#allocation5], 1

</llo_original>
